<compile_context>
chip_gen: v5e
topology: v5e:2x2
jax: 0.10.0
libtpu: 0.0.40
codegen_flags: <defaults>
</compile_context>

<pallas_src>
import jax
import jax.numpy as jnp
from jax.experimental import pallas as pl
from jax.experimental.pallas import tpu as pltpu


def _head_kernel(x_ref, w1_ref, p_ref, out_ref):
    # x_ref  : [TB, H]   CLS rows only (seq slice fused into the BlockSpec DMA)
    # w1_ref : [H, F1]   bf16 fc1 weight, (in, out) layout
    # p_ref  : [3, F1]   f32 packed params: row0 = fc1 bias, row1 = fc2 weight row,
    #                    row2 = [fc2 bias, 0, ...]
    # out_ref: [TB, 1]
    x = x_ref[...].astype(jnp.float32)                     # [TB, H]
    w1 = w1_ref[...].astype(jnp.float32)                   # bf16 -> f32 (cheap VPU cast)

    # fc1: MXU matmul with f32 accumulation.
    h = jnp.dot(x, w1, preferred_element_type=jnp.float32)      # [TB, F1]

    p = p_ref[...]                                          # [3, F1]
    b1 = p[0:1, :]                                          # [1, F1]
    w2_row = p[1:2, :]                                      # [1, F1]
    b2 = p[2:3, 0:1]                                        # [1, 1]

    h = jnp.maximum(h + b1, 0.0)                            # bias + ReLU (VPU)

    # fc2 (N=1): VPU multiply + XLU lane reduction instead of a 1-column MXU matmul.
    y = jnp.sum(h * w2_row, axis=-1, keepdims=True) + b2    # [TB, 1]

    # sigmoid(y) = 0.5 * tanh(0.5*y) + 0.5: single EUP transcendental, stable for all y.
    out_ref[...] = (0.5 * jnp.tanh(0.5 * y) + 0.5).astype(out_ref.dtype)


def roberta_large_classifier_head(last_hidden_state, w1, b1, w2, b2, *, batch_tile=2048):
    """last_hidden_state: [B, S, H] encoder output. Returns [B, 1] sigmoid probabilities.

    Weights use (in, out) layout: w1 [H, F1], b1 [F1], w2 [F1, F2], b2 [F2]
    (transpose nn.Linear's (out, in) weights when importing from PyTorch).
    """
    B, S, H = last_hidden_state.shape
    F1 = w1.shape[1]   # 8
    F2 = w2.shape[1]   # 1

    # Free reshape (contiguous collapse of trailing dims, no copy). The CLS vector of batch
    # row b occupies columns [0, H), so the (TB, H) BlockSpec below pulls exactly the CLS
    # rows from HBM and nothing else.
    x2d = last_hidden_state.reshape(B, S * H)

    # Ship the dominant weight as bf16; accumulate in f32 in-kernel.
    w1_bf16 = w1.astype(jnp.bfloat16)

    # Pack all tiny head params into one small f32 block -> a single DMA.
    packed = jnp.concatenate(
        [
            b1.reshape(1, F1).astype(jnp.float32),
            w2.reshape(F1, F2).T.astype(jnp.float32),
            jnp.pad(b2.reshape(1, F2).astype(jnp.float32), ((0, 0), (0, F1 - F2))),
        ],
        axis=0,
    )  # [3, F1]

    # Batch tiling: whole batch if small; otherwise 2048-row tiles (multiple of 8;
    # ~8 MiB f32 per x buffer, double-buffered -> well under the scoped-VMEM default)
    # on a "parallel" (megacore-shardable) grid axis.
    TB = B if B <= batch_tile else batch_tile
    grid = (pl.cdiv(B, TB),)

    return pl.pallas_call(
        _head_kernel,
        out_shape=jax.ShapeDtypeStruct((B, F2), jnp.float32),
        grid=grid,
        in_specs=[
            pl.BlockSpec((TB, H), lambda i: (i, 0)),    # CLS rows only (lane dim = H)
            pl.BlockSpec((H, F1), lambda i: (0, 0)),    # bf16 fc1 weight (grid-invariant)
            pl.BlockSpec((3, F1), lambda i: (0, 0)),    # packed b1 / w2 / b2
        ],
        out_specs=pl.BlockSpec((TB, F2), lambda i: (i, 0)),
        compiler_params=pltpu.CompilerParams(
            dimension_semantics=("parallel",)),
    )(x2d, w1_bf16, packed)


def custom_classifier_roberta_large_forward(bert_last_hidden_state, w1, b1, w2, b2):
    """Mirrors CustomClassifierRobertaLarge.forward after the encoder:
       bert_out[0][:, 0] -> fc1 -> relu -> fc2 -> sigmoid, with the CLS slice fused into
       the kernel's BlockSpec rather than done as JAX glue."""
    # TODO(synk): the RoBERTa-large encoder itself is not implemented as a Pallas kernel.
    return roberta_large_classifier_head(bert_last_hidden_state, w1, b1, w2, b2)


if __name__ == "__main__":
    # roberta-large: hidden_size = 1024; head: 1024 -> 8 -> 1. Small batch/seq for the test.
    B, S, H = 2, 8, 1024
    F1, F2 = 8, 1

    key = jax.random.PRNGKey(0)
    k_x, k_w1, k_b1, k_w2, k_b2 = jax.random.split(key, 5)

    # Deterministic synthetic encoder output and head parameters.
    bert_out = jax.random.normal(k_x, (B, S, H), dtype=jnp.float32)
    w1 = jax.random.normal(k_w1, (H, F1), dtype=jnp.float32) * 0.02
    b1 = jax.random.normal(k_b1, (F1,), dtype=jnp.float32) * 0.02
    w2 = jax.random.normal(k_w2, (F1, F2), dtype=jnp.float32) * 0.02
    b2 = jax.random.normal(k_b2, (F2,), dtype=jnp.float32) * 0.02

    out = custom_classifier_roberta_large_forward(bert_out, w1, b1, w2, b2)
    out = jax.block_until_ready(out)

    # Pure-JAX reference (uses the same bf16-quantized fc1 weight the kernel consumes).
    cls = bert_out[:, 0, :]
    w1_q = w1.astype(jnp.bfloat16).astype(jnp.float32)
    ref = jax.nn.sigmoid(jnp.maximum(cls @ w1_q + b1, 0.0) @ w2 + b2)

    assert out.shape == (B, F2)
    assert jnp.allclose(out, ref, atol=2e-3, rtol=2e-3), (out, ref)

    print("KERNEL_OK")
</pallas_src>

<mosaic_0001>
module attributes {stable_mosaic.version = 11 : i64} {
  func.func @_head_kernel(%arg0: i32, %arg1: memref<2x1024xf32, #tpu.memory_space<vmem>>, %arg2: memref<1024x8xbf16, #tpu.memory_space<vmem>>, %arg3: memref<3x8xf32, #tpu.memory_space<vmem>>, %arg4: memref<2x1xf32, #tpu.memory_space<vmem>>) attributes {dimension_semantics = [#tpu.dimension_semantics<parallel>], iteration_bounds = array<i64: 1>, scalar_prefetch = 0 : i64, scratch_operands = 0 : i64, tpu.core_type = #tpu.core_type<tc>, window_params = [{transform_indices = @transform_0, window_bounds = array<i64: 2, 1024>}, {pipeline_mode = #tpu.pipeline_mode<synchronous>, transform_indices = @transform_1, window_bounds = array<i64: 1024, 8>}, {pipeline_mode = #tpu.pipeline_mode<synchronous>, transform_indices = @transform_2, window_bounds = array<i64: 3, 8>}, {transform_indices = @transform_3, window_bounds = array<i64: 2, 1>}]} {
    %c0 = arith.constant 0 : index
    %c0_0 = arith.constant 0 : index
    %0 = vector.load %arg1[%c0, %c0_0] : memref<2x1024xf32, #tpu.memory_space<vmem>>, vector<2x1024xf32>
    %c0_1 = arith.constant 0 : index
    %c0_2 = arith.constant 0 : index
    %1 = vector.load %arg2[%c0_1, %c0_2] : memref<1024x8xbf16, #tpu.memory_space<vmem>>, vector<1024x8xbf16>
    %2 = arith.extf %1 : vector<1024x8xbf16> to vector<1024x8xf32>
    %cst = arith.constant dense<0.000000e+00> : vector<2x8xf32>
    %3 = tpu.matmul %0, %2, %cst {dimension_numbers = #tpu.dot_dimension_numbers<[1], [0], [0], [1], [0, 0, 1, 1], [], []>} : vector<2x1024xf32>, vector<1024x8xf32>, vector<2x8xf32> -> vector<2x8xf32>
    %c0_3 = arith.constant 0 : index
    %c0_4 = arith.constant 0 : index
    %4 = vector.load %arg3[%c0_3, %c0_4] : memref<3x8xf32, #tpu.memory_space<vmem>>, vector<3x8xf32>
    %5 = vector.extract_strided_slice %4 {offsets = [0, 0], sizes = [1, 8], strides = [1, 1]} : vector<3x8xf32> to vector<1x8xf32>
    %6 = vector.extract_strided_slice %4 {offsets = [1, 0], sizes = [1, 8], strides = [1, 1]} : vector<3x8xf32> to vector<1x8xf32>
    %7 = vector.extract_strided_slice %4 {offsets = [2, 0], sizes = [1, 1], strides = [1, 1]} : vector<3x8xf32> to vector<1x1xf32>
    %8 = vector.broadcast %5 : vector<1x8xf32> to vector<2x8xf32>
    %9 = arith.addf %3, %8 : vector<2x8xf32>
    %cst_5 = arith.constant 0.000000e+00 : f32
    %10 = vector.broadcast %cst_5 : f32 to vector<2x8xf32>
    %11 = arith.maximumf %9, %10 : vector<2x8xf32>
    %12 = vector.broadcast %6 : vector<1x8xf32> to vector<2x8xf32>
    %13 = arith.mulf %11, %12 : vector<2x8xf32>
    %cst_6 = arith.constant dense<0.000000e+00> : vector<2xf32>
    %14 = vector.multi_reduction <add>, %13, %cst_6 [1] : vector<2x8xf32> to vector<2xf32>
    %15 = vector.shape_cast %14 : vector<2xf32> to vector<2x1xf32>
    %16 = vector.broadcast %7 : vector<1x1xf32> to vector<2x1xf32>
    %17 = arith.addf %15, %16 : vector<2x1xf32>
    %cst_7 = arith.constant 5.000000e-01 : f32
    %18 = vector.broadcast %cst_7 : f32 to vector<2x1xf32>
    %19 = arith.mulf %18, %17 : vector<2x1xf32>
    %20 = math.tanh %19 : vector<2x1xf32>
    %cst_8 = arith.constant 5.000000e-01 : f32
    %21 = vector.broadcast %cst_8 : f32 to vector<2x1xf32>
    %22 = arith.mulf %21, %20 : vector<2x1xf32>
    %cst_9 = arith.constant 5.000000e-01 : f32
    %23 = vector.broadcast %cst_9 : f32 to vector<2x1xf32>
    %24 = arith.addf %22, %23 : vector<2x1xf32>
    %c0_10 = arith.constant 0 : index
    %c0_11 = arith.constant 0 : index
    %25 = vector.load %arg4[%c0_10, %c0_11] : memref<2x1xf32, #tpu.memory_space<vmem>>, vector<2x1xf32>
    tpu.vector_store %arg4[%c0_10, %c0_11], %24 {strides = array<i32>} : memref<2x1xf32, #tpu.memory_space<vmem>>, vector<2x1xf32>,
    return
  }
  func.func @transform_0(%arg0: i32) -> (i32, i32) {
    %c0_i32 = arith.constant 0 : i32
    %c0_i32_0 = arith.constant 0 : i32
    return %arg0, %c0_i32 : i32, i32
  }
  func.func @transform_1(%arg0: i32) -> (i32, i32) {
    %c0_i32 = arith.constant 0 : i32
    %c0_i32_0 = arith.constant 0 : i32
    %c0_i32_1 = arith.constant 0 : i32
    return %c0_i32, %c0_i32_0 : i32, i32
  }
  func.func @transform_2(%arg0: i32) -> (i32, i32) {
    %c0_i32 = arith.constant 0 : i32
    %c0_i32_0 = arith.constant 0 : i32
    %c0_i32_1 = arith.constant 0 : i32
    return %c0_i32, %c0_i32_0 : i32, i32
  }
  func.func @transform_3(%arg0: i32) -> (i32, i32) {
    %c0_i32 = arith.constant 0 : i32
    %c0_i32_0 = arith.constant 0 : i32
    return %arg0, %c0_i32 : i32, i32
  }
}

</mosaic_0001>

<llo_original>
// kernel: tpu_custom_call.1
$region0: #{tpu_custom_call.1}
  #allocation0 [shape = 'u32[]', space=smem, size = 0x4, offset = 0x4, fixed_abs, tag = 'smem constant byte address 0x4 - core index']
  #allocation1 [shape = 'u32[72,128]{1,0:T(1,128)}', space=vmem, size = 0x9000, scoped, tag = 'internal scratch']
  %s0 = inlined_call_operand.vmem [shape: f32[2,8192], index: 0, kind: input, shape index: {}]
  %s1 = inlined_call_operand.vmem [shape: bf16[1024,8], index: 1, kind: input, shape index: {}]
  %s2 = inlined_call_operand.vmem [shape: f32[3,8], index: 2, kind: input, shape index: {}]
  %s3 = inlined_call_operand.vmem [shape: f32[2,1], index: 3, kind: output, shape index: {}]
  %s4 = sld [smem:[#allocation0]]
  $region22: #{tpu_custom_call.1} parent=0
    _
  %s6 = ssub.s32 1, %s4
  %s7 = scalar_select 0, %s6, %s4
  // Predicated region
  $region2: #{tpu_custom_call.1} parent=0 // pred_check
    _
  $region3: #{tpu_custom_call.1} parent=0 // pred_check_branch
    %9 = sbr.rel (0) target = $region5
  $region4: #{tpu_custom_call.1} parent=0 // pred_region
    _
  $region5: #{tpu_custom_call.1} parent=0 // pred_fallthru
    _
  // Predicated region
  $region6: #{tpu_custom_call.1} parent=0 // pred_check
    _
  $region7: #{tpu_custom_call.1} parent=0 // pred_check_branch
    %11 = sbr.rel (0) target = $region9
  $region8: #{tpu_custom_call.1} parent=0 // pred_region
    _
  $region9: #{tpu_custom_call.1} parent=0 // pred_fallthru
    _
  // Predicated region
  $region10: #{tpu_custom_call.1} parent=0 // pred_check
    _
  $region11: #{tpu_custom_call.1} parent=0 // pred_check_branch
    %13 = sbr.rel (0) target = $region13
  $region12: #{tpu_custom_call.1} parent=0 // pred_region
    _
  $region13: #{tpu_custom_call.1} parent=0 // pred_fallthru
    _
  %v14 = vld [vmem:[%s0] sm:$0xff]
  %v15 = vld [vmem:[%s0 + $0x8] sm:$0xff]
  %v16 = vld [vmem:[%s1] sm:$0xf]
  %v17 = vld [vmem:[%s1 + $0x4] sm:$0xf]
  %v18 = vld [vmem:[%s1 + $0x8] sm:$0xf]
  %v19 = vld [vmem:[%s1 + $0xc] sm:$0xf]
  %v20 = vld [vmem:[%s1 + $0x10] sm:$0xf]
  %v21 = vld [vmem:[%s1 + $0x14] sm:$0xf]
  %v22 = vld [vmem:[%s1 + $0x18] sm:$0xf]
  %v23 = vld [vmem:[%s1 + $0x1c] sm:$0xf]
  %v24 = vld [vmem:[%s1 + $0x20] sm:$0xf]
  %v25 = vld [vmem:[%s1 + $0x24] sm:$0xf]
  %v26 = vld [vmem:[%s1 + $0x28] sm:$0xf]
  %v27 = vld [vmem:[%s1 + $0x2c] sm:$0xf]
  %v28 = vld [vmem:[%s1 + $0x30] sm:$0xf]
  %v29 = vld [vmem:[%s1 + $0x34] sm:$0xf]
  %v30 = vld [vmem:[%s1 + $0x38] sm:$0xf]
  %v31 = vld [vmem:[%s1 + $0x3c] sm:$0xf]
  %v32 = vld [vmem:[%s1 + $0x40] sm:$0xf]
  %v33 = vld [vmem:[%s1 + $0x44] sm:$0xf]
  %v34 = vld [vmem:[%s1 + $0x48] sm:$0xf]
  %v35 = vld [vmem:[%s1 + $0x4c] sm:$0xf]
  %v36 = vld [vmem:[%s1 + $0x50] sm:$0xf]
  %v37 = vld [vmem:[%s1 + $0x54] sm:$0xf]
  %v38 = vld [vmem:[%s1 + $0x58] sm:$0xf]
  %v39 = vld [vmem:[%s1 + $0x5c] sm:$0xf]
  %v40 = vld [vmem:[%s1 + $0x60] sm:$0xf]
  %v41 = vld [vmem:[%s1 + $0x64] sm:$0xf]
  %v42 = vld [vmem:[%s1 + $0x68] sm:$0xf]
  %v43 = vld [vmem:[%s1 + $0x6c] sm:$0xf]
  %v44 = vld [vmem:[%s1 + $0x70] sm:$0xf]
  %v45 = vld [vmem:[%s1 + $0x74] sm:$0xf]
  %v46 = vld [vmem:[%s1 + $0x78] sm:$0xf]
  %v47 = vld [vmem:[%s1 + $0x7c] sm:$0xf]
  %v48 = vld [vmem:[%s1 + $0x80] sm:$0xf]
  %v49 = vld [vmem:[%s1 + $0x84] sm:$0xf]
  %v50 = vld [vmem:[%s1 + $0x88] sm:$0xf]
  %v51 = vld [vmem:[%s1 + $0x8c] sm:$0xf]
  %v52 = vld [vmem:[%s1 + $0x90] sm:$0xf]
  %v53 = vld [vmem:[%s1 + $0x94] sm:$0xf]
  %v54 = vld [vmem:[%s1 + $0x98] sm:$0xf]
  %v55 = vld [vmem:[%s1 + $0x9c] sm:$0xf]
  %v56 = vld [vmem:[%s1 + $0xa0] sm:$0xf]
  %v57 = vld [vmem:[%s1 + $0xa4] sm:$0xf]
  %v58 = vld [vmem:[%s1 + $0xa8] sm:$0xf]
  %v59 = vld [vmem:[%s1 + $0xac] sm:$0xf]
  %v60 = vld [vmem:[%s1 + $0xb0] sm:$0xf]
  %v61 = vld [vmem:[%s1 + $0xb4] sm:$0xf]
  %v62 = vld [vmem:[%s1 + $0xb8] sm:$0xf]
  %v63 = vld [vmem:[%s1 + $0xbc] sm:$0xf]
  %v64 = vld [vmem:[%s1 + $0xc0] sm:$0xf]
  %v65 = vld [vmem:[%s1 + $0xc4] sm:$0xf]
  %v66 = vld [vmem:[%s1 + $0xc8] sm:$0xf]
  %v67 = vld [vmem:[%s1 + $0xcc] sm:$0xf]
  %v68 = vld [vmem:[%s1 + $0xd0] sm:$0xf]
  %v69 = vld [vmem:[%s1 + $0xd4] sm:$0xf]
  %v70 = vld [vmem:[%s1 + $0xd8] sm:$0xf]
  %v71 = vld [vmem:[%s1 + $0xdc] sm:$0xf]
  %v72 = vld [vmem:[%s1 + $0xe0] sm:$0xf]
  %v73 = vld [vmem:[%s1 + $0xe4] sm:$0xf]
  %v74 = vld [vmem:[%s1 + $0xe8] sm:$0xf]
  %v75 = vld [vmem:[%s1 + $0xec] sm:$0xf]
  %v76 = vld [vmem:[%s1 + $0xf0] sm:$0xf]
  %v77 = vld [vmem:[%s1 + $0xf4] sm:$0xf]
  %v78 = vld [vmem:[%s1 + $0xf8] sm:$0xf]
  %v79 = vld [vmem:[%s1 + $0xfc] sm:$0xf]
  %v80 = vld [vmem:[%s1 + $0x100] sm:$0xf]
  %v81 = vld [vmem:[%s1 + $0x104] sm:$0xf]
  %v82 = vld [vmem:[%s1 + $0x108] sm:$0xf]
  %v83 = vld [vmem:[%s1 + $0x10c] sm:$0xf]
  %v84 = vld [vmem:[%s1 + $0x110] sm:$0xf]
  %v85 = vld [vmem:[%s1 + $0x114] sm:$0xf]
  %v86 = vld [vmem:[%s1 + $0x118] sm:$0xf]
  %v87 = vld [vmem:[%s1 + $0x11c] sm:$0xf]
  %v88 = vld [vmem:[%s1 + $0x120] sm:$0xf]
  %v89 = vld [vmem:[%s1 + $0x124] sm:$0xf]
  %v90 = vld [vmem:[%s1 + $0x128] sm:$0xf]
  %v91 = vld [vmem:[%s1 + $0x12c] sm:$0xf]
  %v92 = vld [vmem:[%s1 + $0x130] sm:$0xf]
  %v93 = vld [vmem:[%s1 + $0x134] sm:$0xf]
  %v94 = vld [vmem:[%s1 + $0x138] sm:$0xf]
  %v95 = vld [vmem:[%s1 + $0x13c] sm:$0xf]
  %v96 = vld [vmem:[%s1 + $0x140] sm:$0xf]
  %v97 = vld [vmem:[%s1 + $0x144] sm:$0xf]
  %v98 = vld [vmem:[%s1 + $0x148] sm:$0xf]
  %v99 = vld [vmem:[%s1 + $0x14c] sm:$0xf]
  %v100 = vld [vmem:[%s1 + $0x150] sm:$0xf]
  %v101 = vld [vmem:[%s1 + $0x154] sm:$0xf]
  %v102 = vld [vmem:[%s1 + $0x158] sm:$0xf]
  %v103 = vld [vmem:[%s1 + $0x15c] sm:$0xf]
  %v104 = vld [vmem:[%s1 + $0x160] sm:$0xf]
  %v105 = vld [vmem:[%s1 + $0x164] sm:$0xf]
  %v106 = vld [vmem:[%s1 + $0x168] sm:$0xf]
  %v107 = vld [vmem:[%s1 + $0x16c] sm:$0xf]
  %v108 = vld [vmem:[%s1 + $0x170] sm:$0xf]
  %v109 = vld [vmem:[%s1 + $0x174] sm:$0xf]
  %v110 = vld [vmem:[%s1 + $0x178] sm:$0xf]
  %v111 = vld [vmem:[%s1 + $0x17c] sm:$0xf]
  %v112 = vld [vmem:[%s1 + $0x180] sm:$0xf]
  %v113 = vld [vmem:[%s1 + $0x184] sm:$0xf]
  %v114 = vld [vmem:[%s1 + $0x188] sm:$0xf]
  %v115 = vld [vmem:[%s1 + $0x18c] sm:$0xf]
  %v116 = vld [vmem:[%s1 + $0x190] sm:$0xf]
  %v117 = vld [vmem:[%s1 + $0x194] sm:$0xf]
  %v118 = vld [vmem:[%s1 + $0x198] sm:$0xf]
  %v119 = vld [vmem:[%s1 + $0x19c] sm:$0xf]
  %v120 = vld [vmem:[%s1 + $0x1a0] sm:$0xf]
  %v121 = vld [vmem:[%s1 + $0x1a4] sm:$0xf]
  %v122 = vld [vmem:[%s1 + $0x1a8] sm:$0xf]
  %v123 = vld [vmem:[%s1 + $0x1ac] sm:$0xf]
  %v124 = vld [vmem:[%s1 + $0x1b0] sm:$0xf]
  %v125 = vld [vmem:[%s1 + $0x1b4] sm:$0xf]
  %v126 = vld [vmem:[%s1 + $0x1b8] sm:$0xf]
  %v127 = vld [vmem:[%s1 + $0x1bc] sm:$0xf]
  %v128 = vld [vmem:[%s1 + $0x1c0] sm:$0xf]
  %v129 = vld [vmem:[%s1 + $0x1c4] sm:$0xf]
  %v130 = vld [vmem:[%s1 + $0x1c8] sm:$0xf]
  %v131 = vld [vmem:[%s1 + $0x1cc] sm:$0xf]
  %v132 = vld [vmem:[%s1 + $0x1d0] sm:$0xf]
  %v133 = vld [vmem:[%s1 + $0x1d4] sm:$0xf]
  %v134 = vld [vmem:[%s1 + $0x1d8] sm:$0xf]
  %v135 = vld [vmem:[%s1 + $0x1dc] sm:$0xf]
  %v136 = vld [vmem:[%s1 + $0x1e0] sm:$0xf]
  %v137 = vld [vmem:[%s1 + $0x1e4] sm:$0xf]
  %v138 = vld [vmem:[%s1 + $0x1e8] sm:$0xf]
  %v139 = vld [vmem:[%s1 + $0x1ec] sm:$0xf]
  %v140 = vld [vmem:[%s1 + $0x1f0] sm:$0xf]
  %v141 = vld [vmem:[%s1 + $0x1f4] sm:$0xf]
  %v142 = vld [vmem:[%s1 + $0x1f8] sm:$0xf]
  %v143 = vld [vmem:[%s1 + $0x1fc] sm:$0xf]
  %v144 = vunpack.c.l.bf16 %v16
  %v145 = vunpack.c.l.bf16 %v17
  %v146 = vunpack.c.l.bf16 %v18
  %v147 = vunpack.c.l.bf16 %v19
  %v148 = vunpack.c.l.bf16 %v20
  %v149 = vunpack.c.l.bf16 %v21
  %v150 = vunpack.c.l.bf16 %v22
  %v151 = vunpack.c.l.bf16 %v23
  %v152 = vunpack.c.l.bf16 %v24
  %v153 = vunpack.c.l.bf16 %v25
  %v154 = vunpack.c.l.bf16 %v26
  %v155 = vunpack.c.l.bf16 %v27
  %v156 = vunpack.c.l.bf16 %v28
  %v157 = vunpack.c.l.bf16 %v29
  %v158 = vunpack.c.l.bf16 %v30
  %v159 = vunpack.c.l.bf16 %v31
  %v160 = vunpack.c.l.bf16 %v32
  %v161 = vunpack.c.l.bf16 %v33
  %v162 = vunpack.c.l.bf16 %v34
  %v163 = vunpack.c.l.bf16 %v35
  %v164 = vunpack.c.l.bf16 %v36
  %v165 = vunpack.c.l.bf16 %v37
  %v166 = vunpack.c.l.bf16 %v38
  %v167 = vunpack.c.l.bf16 %v39
  %v168 = vunpack.c.l.bf16 %v40
  %v169 = vunpack.c.l.bf16 %v41
  %v170 = vunpack.c.l.bf16 %v42
  %v171 = vunpack.c.l.bf16 %v43
  %v172 = vunpack.c.l.bf16 %v44
  %v173 = vunpack.c.l.bf16 %v45
  %v174 = vunpack.c.l.bf16 %v46
  %v175 = vunpack.c.l.bf16 %v47
  %v176 = vunpack.c.l.bf16 %v48
  %v177 = vunpack.c.l.bf16 %v49
  %v178 = vunpack.c.l.bf16 %v50
  %v179 = vunpack.c.l.bf16 %v51
  %v180 = vunpack.c.l.bf16 %v52
  %v181 = vunpack.c.l.bf16 %v53
  %v182 = vunpack.c.l.bf16 %v54
  %v183 = vunpack.c.l.bf16 %v55
  %v184 = vunpack.c.l.bf16 %v56
  %v185 = vunpack.c.l.bf16 %v57
  %v186 = vunpack.c.l.bf16 %v58
  %v187 = vunpack.c.l.bf16 %v59
  %v188 = vunpack.c.l.bf16 %v60
  %v189 = vunpack.c.l.bf16 %v61
  %v190 = vunpack.c.l.bf16 %v62
  %v191 = vunpack.c.l.bf16 %v63
  %v192 = vunpack.c.l.bf16 %v64
  %v193 = vunpack.c.l.bf16 %v65
  %v194 = vunpack.c.l.bf16 %v66
  %v195 = vunpack.c.l.bf16 %v67
  %v196 = vunpack.c.l.bf16 %v68
  %v197 = vunpack.c.l.bf16 %v69
  %v198 = vunpack.c.l.bf16 %v70
  %v199 = vunpack.c.l.bf16 %v71
  %v200 = vunpack.c.l.bf16 %v72
  %v201 = vunpack.c.l.bf16 %v73
  %v202 = vunpack.c.l.bf16 %v74
  %v203 = vunpack.c.l.bf16 %v75
  %v204 = vunpack.c.l.bf16 %v76
  %v205 = vunpack.c.l.bf16 %v77
  %v206 = vunpack.c.l.bf16 %v78
  %v207 = vunpack.c.l.bf16 %v79
  %v208 = vunpack.c.l.bf16 %v80
  %v209 = vunpack.c.l.bf16 %v81
  %v210 = vunpack.c.l.bf16 %v82
  %v211 = vunpack.c.l.bf16 %v83
  %v212 = vunpack.c.l.bf16 %v84
  %v213 = vunpack.c.l.bf16 %v85
  %v214 = vunpack.c.l.bf16 %v86
  %v215 = vunpack.c.l.bf16 %v87
  %v216 = vunpack.c.l.bf16 %v88
  %v217 = vunpack.c.l.bf16 %v89
  %v218 = vunpack.c.l.bf16 %v90
  %v219 = vunpack.c.l.bf16 %v91
  %v220 = vunpack.c.l.bf16 %v92
  %v221 = vunpack.c.l.bf16 %v93
  %v222 = vunpack.c.l.bf16 %v94
  %v223 = vunpack.c.l.bf16 %v95
  %v224 = vunpack.c.l.bf16 %v96
  %v225 = vunpack.c.l.bf16 %v97
  %v226 = vunpack.c.l.bf16 %v98
  %v227 = vunpack.c.l.bf16 %v99
  %v228 = vunpack.c.l.bf16 %v100
  %v229 = vunpack.c.l.bf16 %v101
  %v230 = vunpack.c.l.bf16 %v102
  %v231 = vunpack.c.l.bf16 %v103
  %v232 = vunpack.c.l.bf16 %v104
  %v233 = vunpack.c.l.bf16 %v105
  %v234 = vunpack.c.l.bf16 %v106
  %v235 = vunpack.c.l.bf16 %v107
  %v236 = vunpack.c.l.bf16 %v108
  %v237 = vunpack.c.l.bf16 %v109
  %v238 = vunpack.c.l.bf16 %v110
  %v239 = vunpack.c.l.bf16 %v111
  %v240 = vunpack.c.l.bf16 %v112
  %v241 = vunpack.c.l.bf16 %v113
  %v242 = vunpack.c.l.bf16 %v114
  %v243 = vunpack.c.l.bf16 %v115
  %v244 = vunpack.c.l.bf16 %v116
  %v245 = vunpack.c.l.bf16 %v117
  %v246 = vunpack.c.l.bf16 %v118
  %v247 = vunpack.c.l.bf16 %v119
  %v248 = vunpack.c.l.bf16 %v120
  %v249 = vunpack.c.l.bf16 %v121
  %v250 = vunpack.c.l.bf16 %v122
  %v251 = vunpack.c.l.bf16 %v123
  %v252 = vunpack.c.l.bf16 %v124
  %v253 = vunpack.c.l.bf16 %v125
  %v254 = vunpack.c.l.bf16 %v126
  %v255 = vunpack.c.l.bf16 %v127
  %v256 = vunpack.c.l.bf16 %v128
  %v257 = vunpack.c.l.bf16 %v129
  %v258 = vunpack.c.l.bf16 %v130
  %v259 = vunpack.c.l.bf16 %v131
  %v260 = vunpack.c.l.bf16 %v132
  %v261 = vunpack.c.l.bf16 %v133
  %v262 = vunpack.c.l.bf16 %v134
  %v263 = vunpack.c.l.bf16 %v135
  %v264 = vunpack.c.l.bf16 %v136
  %v265 = vunpack.c.l.bf16 %v137
  %v266 = vunpack.c.l.bf16 %v138
  %v267 = vunpack.c.l.bf16 %v139
  %v268 = vunpack.c.l.bf16 %v140
  %v269 = vunpack.c.l.bf16 %v141
  %v270 = vunpack.c.l.bf16 %v142
  %v271 = vunpack.c.l.bf16 %v143
  %v272 = vld [vmem:[%s2] sm:$0x7]
  %v273 = vperm.slane %v272, 0
  %276 = vst [vmem:[#allocation1] ss:$4 sm:$0xff] %v14
  %s277 = scalar_lea.vmem [#allocation1], 32
  %278 = vst [vmem:[%s277] ss:$4 sm:$0xff] %v15
  %v279 = vld.sshfl [vmem:[#allocation1] sm:$0xff pattern:$0x73625140]
  %v280 = vld.sshfl [vmem:[#allocation1 + $0x8] sm:$0xff pattern:$0x73625140]
  %v281 = vld.sshfl [vmem:[#allocation1 + $0x10] sm:$0xff pattern:$0x73625140]
  %v282 = vld.sshfl [vmem:[#allocation1 + $0x18] sm:$0xff pattern:$0x73625140]
  %v283 = vld.sshfl [vmem:[#allocation1 + $0x20] sm:$0xff pattern:$0x73625140]
  %v284 = vld.sshfl [vmem:[#allocation1 + $0x28] sm:$0xff pattern:$0x73625140]
  %v285 = vld.sshfl [vmem:[#allocation1 + $0x30] sm:$0xff pattern:$0x73625140]
  %v286 = vld.sshfl [vmem:[#allocation1 + $0x38] sm:$0xff pattern:$0x73625140]
  %295 = vmatpush.msra.mxu0 %v159
  %296 = vmatpush.msra.mxu0 %v158
  %297 = vmatpush.msra.mxu0 %v157
  %298 = vmatpush.msra.mxu0 %v156
  %299 = vmatpush.msra.mxu0 %v155
  %300 = vmatpush.msra.mxu0 %v154
  %301 = vmatpush.msra.mxu0 %v153
  %302 = vmatpush.msra.mxu0 %v152
  %303 = vmatpush.msra.mxu0 %v151
  %304 = vmatpush.msra.mxu0 %v150
  %305 = vmatpush.msra.mxu0 %v149
  %306 = vmatpush.msra.mxu0 %v148
  %307 = vmatpush.msra.mxu0 %v147
  %308 = vmatpush.msra.mxu0 %v146
  %309 = vmatpush.msra.mxu0 %v145
  %310 = vmatpush.msra.mxu0 %v144
  %311 = vmatmul.f32.gmra.mxu0 %v279
  %v312 = vpop.f32.mrf.mxu0
  %v313 = vadd.f32 %v273, %v312
  %314 = vdwg.mxu0
  %315 = vmatpush.msra.mxu0 %v175
  %316 = vmatpush.msra.mxu0 %v174
  %317 = vmatpush.msra.mxu0 %v173
  %318 = vmatpush.msra.mxu0 %v172
  %319 = vmatpush.msra.mxu0 %v171
  %320 = vmatpush.msra.mxu0 %v170
  %321 = vmatpush.msra.mxu0 %v169
  %322 = vmatpush.msra.mxu0 %v168
  %323 = vmatpush.msra.mxu0 %v167
  %324 = vmatpush.msra.mxu0 %v166
  %325 = vmatpush.msra.mxu0 %v165
  %326 = vmatpush.msra.mxu0 %v164
  %327 = vmatpush.msra.mxu0 %v163
  %328 = vmatpush.msra.mxu0 %v162
  %329 = vmatpush.msra.mxu0 %v161
  %330 = vmatpush.msra.mxu0 %v160
  %331 = vmatmul.f32.gmra.mxu0 %v280
  %v332 = vpop.f32.mrf.mxu0
  %v333 = vadd.f32 %v313, %v332
  %334 = vdwg.mxu0
  %335 = vmatpush.msra.mxu0 %v191
  %336 = vmatpush.msra.mxu0 %v190
  %337 = vmatpush.msra.mxu0 %v189
  %338 = vmatpush.msra.mxu0 %v188
  %339 = vmatpush.msra.mxu0 %v187
  %340 = vmatpush.msra.mxu0 %v186
  %341 = vmatpush.msra.mxu0 %v185
  %342 = vmatpush.msra.mxu0 %v184
  %343 = vmatpush.msra.mxu0 %v183
  %344 = vmatpush.msra.mxu0 %v182
  %345 = vmatpush.msra.mxu0 %v181
  %346 = vmatpush.msra.mxu0 %v180
  %347 = vmatpush.msra.mxu0 %v179
  %348 = vmatpush.msra.mxu0 %v178
  %349 = vmatpush.msra.mxu0 %v177
  %350 = vmatpush.msra.mxu0 %v176
  %351 = vmatmul.f32.gmra.mxu0 %v281
  %v352 = vpop.f32.mrf.mxu0
  %v353 = vadd.f32 %v333, %v352
  %354 = vdwg.mxu0
  %355 = vmatpush.msra.mxu0 %v207
  %356 = vmatpush.msra.mxu0 %v206
  %357 = vmatpush.msra.mxu0 %v205
  %358 = vmatpush.msra.mxu0 %v204
  %359 = vmatpush.msra.mxu0 %v203
  %360 = vmatpush.msra.mxu0 %v202
  %361 = vmatpush.msra.mxu0 %v201
  %362 = vmatpush.msra.mxu0 %v200
  %363 = vmatpush.msra.mxu0 %v199
  %364 = vmatpush.msra.mxu0 %v198
  %365 = vmatpush.msra.mxu0 %v197
  %366 = vmatpush.msra.mxu0 %v196
  %367 = vmatpush.msra.mxu0 %v195
  %368 = vmatpush.msra.mxu0 %v194
  %369 = vmatpush.msra.mxu0 %v193
  %370 = vmatpush.msra.mxu0 %v192
  %371 = vmatmul.f32.gmra.mxu0 %v282
  %v372 = vpop.f32.mrf.mxu0
  %v373 = vadd.f32 %v353, %v372
  %374 = vdwg.mxu0
  %375 = vmatpush.msra.mxu0 %v223
  %376 = vmatpush.msra.mxu0 %v222
  %377 = vmatpush.msra.mxu0 %v221
  %378 = vmatpush.msra.mxu0 %v220
  %379 = vmatpush.msra.mxu0 %v219
  %380 = vmatpush.msra.mxu0 %v218
  %381 = vmatpush.msra.mxu0 %v217
  %382 = vmatpush.msra.mxu0 %v216
  %383 = vmatpush.msra.mxu0 %v215
  %384 = vmatpush.msra.mxu0 %v214
  %385 = vmatpush.msra.mxu0 %v213
  %386 = vmatpush.msra.mxu0 %v212
  %387 = vmatpush.msra.mxu0 %v211
  %388 = vmatpush.msra.mxu0 %v210
  %389 = vmatpush.msra.mxu0 %v209
  %390 = vmatpush.msra.mxu0 %v208
  %391 = vmatmul.f32.gmra.mxu0 %v283
  %v392 = vpop.f32.mrf.mxu0
  %v393 = vadd.f32 %v373, %v392
  %394 = vdwg.mxu0
  %395 = vmatpush.msra.mxu0 %v239
  %396 = vmatpush.msra.mxu0 %v238
  %397 = vmatpush.msra.mxu0 %v237
  %398 = vmatpush.msra.mxu0 %v236
  %399 = vmatpush.msra.mxu0 %v235
  %400 = vmatpush.msra.mxu0 %v234
  %401 = vmatpush.msra.mxu0 %v233
  %402 = vmatpush.msra.mxu0 %v232
  %403 = vmatpush.msra.mxu0 %v231
  %404 = vmatpush.msra.mxu0 %v230
  %405 = vmatpush.msra.mxu0 %v229
  %406 = vmatpush.msra.mxu0 %v228
  %407 = vmatpush.msra.mxu0 %v227
  %408 = vmatpush.msra.mxu0 %v226
  %409 = vmatpush.msra.mxu0 %v225
  %410 = vmatpush.msra.mxu0 %v224
  %411 = vmatmul.f32.gmra.mxu0 %v284
  %v412 = vpop.f32.mrf.mxu0
  %v413 = vadd.f32 %v393, %v412
  %414 = vdwg.mxu0
  %415 = vmatpush.msra.mxu0 %v255
  %416 = vmatpush.msra.mxu0 %v254
  %417 = vmatpush.msra.mxu0 %v253
  %418 = vmatpush.msra.mxu0 %v252
  %419 = vmatpush.msra.mxu0 %v251
  %420 = vmatpush.msra.mxu0 %v250
  %421 = vmatpush.msra.mxu0 %v249
  %422 = vmatpush.msra.mxu0 %v248
  %423 = vmatpush.msra.mxu0 %v247
  %424 = vmatpush.msra.mxu0 %v246
  %425 = vmatpush.msra.mxu0 %v245
  %426 = vmatpush.msra.mxu0 %v244
  %427 = vmatpush.msra.mxu0 %v243
  %428 = vmatpush.msra.mxu0 %v242
  %429 = vmatpush.msra.mxu0 %v241
  %430 = vmatpush.msra.mxu0 %v240
  %431 = vmatmul.f32.gmra.mxu0 %v285
  %v432 = vpop.f32.mrf.mxu0
  %v433 = vadd.f32 %v413, %v432
  %434 = vdwg.mxu0
  %435 = vmatpush.msra.mxu0 %v271
  %436 = vmatpush.msra.mxu0 %v270
  %437 = vmatpush.msra.mxu0 %v269
  %438 = vmatpush.msra.mxu0 %v268
  %439 = vmatpush.msra.mxu0 %v267
  %440 = vmatpush.msra.mxu0 %v266
  %441 = vmatpush.msra.mxu0 %v265
  %442 = vmatpush.msra.mxu0 %v264
  %443 = vmatpush.msra.mxu0 %v263
  %444 = vmatpush.msra.mxu0 %v262
  %445 = vmatpush.msra.mxu0 %v261
  %446 = vmatpush.msra.mxu0 %v260
  %447 = vmatpush.msra.mxu0 %v259
  %448 = vmatpush.msra.mxu0 %v258
  %449 = vmatpush.msra.mxu0 %v257
  %450 = vmatpush.msra.mxu0 %v256
  %451 = vmatmul.f32.gmra.mxu0 %v286
  %v452 = vpop.f32.mrf.mxu0
  %v453 = vadd.f32 %v433, %v452
  %454 = vdwg.mxu0
  %v455 = vmax.f32 %v453, 0.0
  %v456 = vperm.slane %v272, 1
  %v457 = vmul.f32 %v455, %v456
  %vm458 = vcmask 58368
  %v459 = vsel %vm458, %v457, 0.0
  %460 = vadd.xlane.f32.xlu0 %v459
  %v461 = vpop.xlane.xlu0 %460
  %v462 = vperm.slane %v272, 2
  %v463 = vadd.f32 %v461, %v462
  %v464 = vmul.f32 %v463, 0.5
  %v465 = vtanh.pop %v464
  %v466 = vmul.f32 %v465, 0.5
  %v467 = vadd.f32 %v466, 0.5
  %vm468 = vcmask 1024
  %469 = vst.msk [vmem:[%s3] sm:$0x3] %vm468, %v467
  // Predicated region
  $region14: #{tpu_custom_call.1} parent=0 // pred_check
    _
  $region15: #{tpu_custom_call.1} parent=0 // pred_check_branch
    %471 = sbr.rel (0) target = $region17
  $region16: #{tpu_custom_call.1} parent=0 // pred_region
    _
  $region17: #{tpu_custom_call.1} parent=0 // pred_fallthru
    _
  // Predicated region
  $region18: #{tpu_custom_call.1} parent=0 // pred_check
    _
  $region19: #{tpu_custom_call.1} parent=0 // pred_check_branch
    %473 = sbr.rel (0) target = $region21
  $region20: #{tpu_custom_call.1} parent=0 // pred_region
    _
  $region21: #{tpu_custom_call.1} parent=0 // pred_fallthru
    _

</llo_original>
